<compile_context>
chip_gen: v6e
topology: v6e:2x2x1
jax: 0.10.0
libtpu: 0.0.40
codegen_flags: <defaults>
</compile_context>

<pallas_src>
import jax
import jax.numpy as jnp
from jax.experimental import pallas as pl
from jax.experimental.pallas import tpu as pltpu


# ----------------------------------------------------------------------------
# Pallas kernel factory: (base + FM correction) + N-layer MLP + sigmoid
# ----------------------------------------------------------------------------
def _make_deepfm_kernel(num_hidden):
    def kernel(*refs):
        # refs = (base, dnn_in, w1, b1, ..., wN, bN, w_out_row, out)
        base_ref, dnn_in_ref = refs[0], refs[1]
        w_refs = refs[2:-1]
        out_ref = refs[-1]

        x = dnn_in_ref[...]                                 # (TB, F*D) bf16
        x32 = x.astype(jnp.float32)

        # FM second-order term: base already carries 0.5*sum_d(field_sum_d^2);
        # subtract 0.5*sum over ALL F*D columns of x^2 (identical to the
        # per-field sum_of_square summed over D).  Pure lane reduce -> XLU.
        sum_sq = 0.5 * jnp.sum(x32 * x32, axis=-1, keepdims=True)    # (TB, 1)

        # Deep part: bf16 MXU matmuls, f32 accumulation + bias + ReLU,
        # bf16 activations between layers (last layer kept f32 for VPU head).
        h = x
        for l in range(num_hidden):
            w = w_refs[2 * l][...]                          # (Din, Dout) bf16
            b = w_refs[2 * l + 1][...]                      # (1, Dout)   f32
            a = jnp.maximum(
                jnp.dot(h, w, preferred_element_type=jnp.float32) + b, 0.0)
            h = a if l == num_hidden - 1 else a.astype(jnp.bfloat16)

        # final layer has N=1: VPU broadcast-mul + lane reduce, not the MXU.
        w_out_row = w_refs[-1][...]                         # (1, H_last) f32
        dnn = jnp.sum(h * w_out_row, axis=-1, keepdims=True)         # (TB, 1)

        out_ref[...] = jax.nn.sigmoid(base_ref[...] - sum_sq + dnn)

    return kernel


# ----------------------------------------------------------------------------
# Tiling: TB <= 1024, multiple of 8, even tile count (v7x dual-TC), low padding
# ----------------------------------------------------------------------------
def _round_up(x, m):
    return ((x + m - 1) // m) * m


def _choose_tiling(B):
    g = pl.cdiv(B, 1024)
    g = max(2, g + (g % 2))                      # even target tile count, >= 2
    tb = max(16, _round_up(pl.cdiv(B, g), 8))    # sublane-aligned tile height
    g = pl.cdiv(B, tb)                           # actual tile count
    return tb, g


# ----------------------------------------------------------------------------
# Wrapper: JAX glue (gathers / operand assembly) + Pallas kernel call
# ----------------------------------------------------------------------------
def deepfm_forward(params, sparse_idx, dense_x):
    B = sparse_idx.shape[0]
    D = params["emb_tables"][0].shape[1]
    Dn = dense_x.shape[1]
    S = len(params["emb_tables"])
    F = S + Dn
    FD = F * D

    # ---- glue: gathers + first-order / FM square-of-sum folding (f32) ------
    sparse_embs = [tbl[sparse_idx[:, i]] for i, tbl in enumerate(params["emb_tables"])]
    dense_embs = [dense_x[:, j:j + 1] * params["dense_params"][j] for j in range(Dn)]
    all_embs = sparse_embs + dense_embs                               # F x (B, D)

    field_sum = all_embs[0]
    for e in all_embs[1:]:
        field_sum = field_sum + e                                     # (B, D) f32

    lin = jnp.zeros((B, 1), jnp.float32)
    for i, tbl in enumerate(params["lin_emb_tables"]):
        lin = lin + tbl[sparse_idx[:, i]]
    lin = lin + jnp.sum(dense_x * params["lin_dense_w"], axis=-1, keepdims=True)

    # base = linear term + global bias + final DNN bias + 0.5*sum_d(field_sum^2)
    base = (lin + params["bias"] + params["b_out"]
            + 0.5 * jnp.sum(field_sum * field_sum, axis=-1, keepdims=True)
            ).astype(jnp.float32)                                     # (B, 1)

    # single flattened FM/DNN input (bf16 MXU operand)
    dnn_in = jnp.concatenate(all_embs, axis=1).astype(jnp.bfloat16)   # (B, F*D)

    dnn_ws = [w.astype(jnp.bfloat16) for w in params["dnn_ws"]]
    dnn_bs = [b.astype(jnp.float32) for b in params["dnn_bs"]]
    w_out_row = params["w_out"].astype(jnp.float32).T                 # (1, H_last)

    # ---- batch tiling -------------------------------------------------------
    TB, G = _choose_tiling(B)
    B_pad = G * TB
    if B_pad != B:
        base = jnp.pad(base, ((0, B_pad - B), (0, 0)))
        dnn_in = jnp.pad(dnn_in, ((0, B_pad - B), (0, 0)))

    def batch_map(i):
        return (i, 0)

    def const_map(i):
        return (0, 0)

    weight_inputs, weight_specs = [], []
    for w, b in zip(dnn_ws, dnn_bs):
        weight_inputs += [w, b]
        weight_specs += [pl.BlockSpec(w.shape, const_map),
                         pl.BlockSpec(b.shape, const_map)]
    weight_inputs.append(w_out_row)
    weight_specs.append(pl.BlockSpec(w_out_row.shape, const_map))

    kernel = _make_deepfm_kernel(len(dnn_ws))

    out = pl.pallas_call(
        kernel,
        grid=(G,),
        in_specs=[pl.BlockSpec((TB, 1), batch_map),
                  pl.BlockSpec((TB, FD), batch_map)] + weight_specs,
        out_specs=pl.BlockSpec((TB, 1), batch_map),
        out_shape=jax.ShapeDtypeStruct((B_pad, 1), jnp.float32),
        compiler_params=pltpu.CompilerParams(
            dimension_semantics=("parallel",),          # v7x: shard batch across 2 TCs
            vmem_limit_bytes=32 * 1024 * 1024,          # headroom under v7x's 64 MiB
        ),
    )(base, dnn_in, *weight_inputs)
    return out[:B, 0]                                                 # (B,)


# ----------------------------------------------------------------------------
# Pure-JAX reference (mirrors the PyTorch forward, eval mode, f32 throughout)
# ----------------------------------------------------------------------------
def deepfm_reference(params, sparse_idx, dense_x):
    B = sparse_idx.shape[0]
    out = jnp.broadcast_to(params["bias"], (B, 1))
    for i, tbl in enumerate(params["lin_emb_tables"]):
        out = out + tbl[sparse_idx[:, i]]
    out = out + jnp.sum(dense_x * params["lin_dense_w"], axis=-1, keepdims=True)

    sparse_embs = [tbl[sparse_idx[:, i]] for i, tbl in enumerate(params["emb_tables"])]
    dense_embs = [dense_x[:, j:j + 1] * params["dense_params"][j]
                  for j in range(dense_x.shape[1])]
    stack = jnp.stack(sparse_embs + dense_embs, axis=1)
    square_of_sum = jnp.sum(stack, axis=1) ** 2
    sum_of_square = jnp.sum(stack ** 2, axis=1)
    fm = 0.5 * jnp.sum(square_of_sum - sum_of_square, axis=1, keepdims=True)
    out = out + fm

    h = stack.reshape(B, -1)
    for w, b in zip(params["dnn_ws"], params["dnn_bs"]):
        h = jnp.maximum(h @ w + b, 0.0)
    out = out + h @ params["w_out"] + params["b_out"]
    return jax.nn.sigmoid(out[:, 0])


# ----------------------------------------------------------------------------
if __name__ == "__main__":
    # Small, forward-consistent config: 3 sparse feats, 2 dense feats,
    # embedding_dim = 8, default hidden_units = [256, 128, 64], batch = 8.
    B = 8
    vocab_sizes = [11, 7, 5]
    S = len(vocab_sizes)
    Dn = 2
    D = 8
    F = S + Dn
    hidden_units = [256, 128, 64]

    key = jax.random.PRNGKey(0)
    ks = jax.random.split(key, 40)
    k = iter(ks)

    dnn_dims = [F * D] + hidden_units
    params = {
        # first-order weights
        "lin_emb_tables": [0.1 * jax.random.normal(next(k), (v, 1), jnp.float32)
                           for v in vocab_sizes],
        "lin_dense_w": 0.1 * jax.random.normal(next(k), (1, Dn), jnp.float32),
        "bias": 0.05 * jax.random.normal(next(k), (1, 1), jnp.float32),
        # second-order embeddings
        "emb_tables": [0.1 * jax.random.normal(next(k), (v, D), jnp.float32)
                       for v in vocab_sizes],
        "dense_params": [0.1 * jax.random.normal(next(k), (D,), jnp.float32)
                         for _ in range(Dn)],
        # DNN
        "dnn_ws": [jax.random.normal(next(k), (din, dout), jnp.float32) / jnp.sqrt(din)
                   for din, dout in zip(dnn_dims[:-1], dnn_dims[1:])],
        "dnn_bs": [0.01 * jax.random.normal(next(k), (1, dout), jnp.float32)
                   for dout in hidden_units],
        "w_out": (jax.random.normal(next(k), (hidden_units[-1], 1), jnp.float32)
                  / jnp.sqrt(hidden_units[-1])),
        "b_out": 0.01 * jax.random.normal(next(k), (1, 1), jnp.float32),
    }

    sparse_idx = jnp.stack(
        [jax.random.randint(next(k), (B,), 0, v, jnp.int32) for v in vocab_sizes],
        axis=1)                                                   # (B, S) int32
    dense_x = jax.random.normal(next(k), (B, Dn), jnp.float32)    # (B, Dn)

    out = deepfm_forward(params, sparse_idx, dense_x)
    out = jax.block_until_ready(out)

    ref = deepfm_reference(params, sparse_idx, dense_x)
    assert out.shape == (B,)
    # tolerance loosened for the bf16 MXU operands (f32 accumulation).
    assert jnp.allclose(out, ref, atol=2e-2, rtol=2e-2), (out, ref)

    print("KERNEL_OK")
</pallas_src>

<mosaic_0001>
module attributes {stable_mosaic.version = 11 : i64} {
  func.func @kernel(%arg0: i32, %arg1: memref<16x1xf32, #tpu.memory_space<vmem>>, %arg2: memref<16x40xbf16, #tpu.memory_space<vmem>>, %arg3: memref<40x256xbf16, #tpu.memory_space<vmem>>, %arg4: memref<1x256xf32, #tpu.memory_space<vmem>>, %arg5: memref<256x128xbf16, #tpu.memory_space<vmem>>, %arg6: memref<1x128xf32, #tpu.memory_space<vmem>>, %arg7: memref<128x64xbf16, #tpu.memory_space<vmem>>, %arg8: memref<1x64xf32, #tpu.memory_space<vmem>>, %arg9: memref<1x64xf32, #tpu.memory_space<vmem>>, %arg10: memref<16x1xf32, #tpu.memory_space<vmem>>) attributes {dimension_semantics = [#tpu.dimension_semantics<parallel>], iteration_bounds = array<i64: 1>, scalar_prefetch = 0 : i64, scratch_operands = 0 : i64, tpu.core_type = #tpu.core_type<tc>, window_params = [{transform_indices = @transform_0, window_bounds = array<i64: 16, 1>}, {transform_indices = @transform_1, window_bounds = array<i64: 16, 40>}, {pipeline_mode = #tpu.pipeline_mode<synchronous>, transform_indices = @transform_2, window_bounds = array<i64: 40, 256>}, {pipeline_mode = #tpu.pipeline_mode<synchronous>, transform_indices = @transform_3, window_bounds = array<i64: 1, 256>}, {pipeline_mode = #tpu.pipeline_mode<synchronous>, transform_indices = @transform_4, window_bounds = array<i64: 256, 128>}, {pipeline_mode = #tpu.pipeline_mode<synchronous>, transform_indices = @transform_5, window_bounds = array<i64: 1, 128>}, {pipeline_mode = #tpu.pipeline_mode<synchronous>, transform_indices = @transform_6, window_bounds = array<i64: 128, 64>}, {pipeline_mode = #tpu.pipeline_mode<synchronous>, transform_indices = @transform_7, window_bounds = array<i64: 1, 64>}, {pipeline_mode = #tpu.pipeline_mode<synchronous>, transform_indices = @transform_8, window_bounds = array<i64: 1, 64>}, {transform_indices = @transform_9, window_bounds = array<i64: 16, 1>}]} {
    %c0 = arith.constant 0 : index
    %c0_0 = arith.constant 0 : index
    %0 = vector.load %arg2[%c0, %c0_0] : memref<16x40xbf16, #tpu.memory_space<vmem>>, vector<16x40xbf16>
    %1 = arith.extf %0 : vector<16x40xbf16> to vector<16x40xf32>
    %2 = arith.mulf %1, %1 : vector<16x40xf32>
    %cst = arith.constant dense<0.000000e+00> : vector<16xf32>
    %3 = vector.multi_reduction <add>, %2, %cst [1] : vector<16x40xf32> to vector<16xf32>
    %4 = vector.shape_cast %3 : vector<16xf32> to vector<16x1xf32>
    %cst_1 = arith.constant 5.000000e-01 : f32
    %5 = vector.broadcast %cst_1 : f32 to vector<16x1xf32>
    %6 = arith.mulf %5, %4 : vector<16x1xf32>
    %c0_2 = arith.constant 0 : index
    %c0_3 = arith.constant 0 : index
    %7 = vector.load %arg3[%c0_2, %c0_3] : memref<40x256xbf16, #tpu.memory_space<vmem>>, vector<40x256xbf16>
    %c0_4 = arith.constant 0 : index
    %c0_5 = arith.constant 0 : index
    %8 = vector.load %arg4[%c0_4, %c0_5] : memref<1x256xf32, #tpu.memory_space<vmem>>, vector<1x256xf32>
    %cst_6 = arith.constant dense<0.000000e+00> : vector<16x256xf32>
    %9 = tpu.matmul %0, %7, %cst_6 {dimension_numbers = #tpu.dot_dimension_numbers<[1], [0], [0], [1], [0, 0, 1, 1], [], []>} : vector<16x40xbf16>, vector<40x256xbf16>, vector<16x256xf32> -> vector<16x256xf32>
    %10 = vector.broadcast %8 : vector<1x256xf32> to vector<16x256xf32>
    %11 = arith.addf %9, %10 : vector<16x256xf32>
    %cst_7 = arith.constant 0.000000e+00 : f32
    %12 = vector.broadcast %cst_7 : f32 to vector<16x256xf32>
    %13 = arith.maximumf %11, %12 : vector<16x256xf32>
    %14 = arith.truncf %13 : vector<16x256xf32> to vector<16x256xbf16>
    %c0_8 = arith.constant 0 : index
    %c0_9 = arith.constant 0 : index
    %15 = vector.load %arg5[%c0_8, %c0_9] : memref<256x128xbf16, #tpu.memory_space<vmem>>, vector<256x128xbf16>
    %c0_10 = arith.constant 0 : index
    %c0_11 = arith.constant 0 : index
    %16 = vector.load %arg6[%c0_10, %c0_11] : memref<1x128xf32, #tpu.memory_space<vmem>>, vector<1x128xf32>
    %cst_12 = arith.constant dense<0.000000e+00> : vector<16x128xf32>
    %17 = tpu.matmul %14, %15, %cst_12 {dimension_numbers = #tpu.dot_dimension_numbers<[1], [0], [0], [1], [0, 0, 1, 1], [], []>} : vector<16x256xbf16>, vector<256x128xbf16>, vector<16x128xf32> -> vector<16x128xf32>
    %18 = vector.broadcast %16 : vector<1x128xf32> to vector<16x128xf32>
    %19 = arith.addf %17, %18 : vector<16x128xf32>
    %cst_13 = arith.constant 0.000000e+00 : f32
    %20 = vector.broadcast %cst_13 : f32 to vector<16x128xf32>
    %21 = arith.maximumf %19, %20 : vector<16x128xf32>
    %22 = arith.truncf %21 : vector<16x128xf32> to vector<16x128xbf16>
    %c0_14 = arith.constant 0 : index
    %c0_15 = arith.constant 0 : index
    %23 = vector.load %arg7[%c0_14, %c0_15] : memref<128x64xbf16, #tpu.memory_space<vmem>>, vector<128x64xbf16>
    %c0_16 = arith.constant 0 : index
    %c0_17 = arith.constant 0 : index
    %24 = vector.load %arg8[%c0_16, %c0_17] : memref<1x64xf32, #tpu.memory_space<vmem>>, vector<1x64xf32>
    %cst_18 = arith.constant dense<0.000000e+00> : vector<16x64xf32>
    %25 = tpu.matmul %22, %23, %cst_18 {dimension_numbers = #tpu.dot_dimension_numbers<[1], [0], [0], [1], [0, 0, 1, 1], [], []>} : vector<16x128xbf16>, vector<128x64xbf16>, vector<16x64xf32> -> vector<16x64xf32>
    %26 = vector.broadcast %24 : vector<1x64xf32> to vector<16x64xf32>
    %27 = arith.addf %25, %26 : vector<16x64xf32>
    %cst_19 = arith.constant 0.000000e+00 : f32
    %28 = vector.broadcast %cst_19 : f32 to vector<16x64xf32>
    %29 = arith.maximumf %27, %28 : vector<16x64xf32>
    %c0_20 = arith.constant 0 : index
    %c0_21 = arith.constant 0 : index
    %30 = vector.load %arg9[%c0_20, %c0_21] : memref<1x64xf32, #tpu.memory_space<vmem>>, vector<1x64xf32>
    %31 = vector.broadcast %30 : vector<1x64xf32> to vector<16x64xf32>
    %32 = arith.mulf %29, %31 : vector<16x64xf32>
    %cst_22 = arith.constant dense<0.000000e+00> : vector<16xf32>
    %33 = vector.multi_reduction <add>, %32, %cst_22 [1] : vector<16x64xf32> to vector<16xf32>
    %34 = vector.shape_cast %33 : vector<16xf32> to vector<16x1xf32>
    %c0_23 = arith.constant 0 : index
    %c0_24 = arith.constant 0 : index
    %35 = vector.load %arg1[%c0_23, %c0_24] : memref<16x1xf32, #tpu.memory_space<vmem>>, vector<16x1xf32>
    %36 = arith.subf %35, %6 : vector<16x1xf32>
    %37 = arith.addf %36, %34 : vector<16x1xf32>
    %38 = arith.negf %37 : vector<16x1xf32>
    %39 = math.exp %38 : vector<16x1xf32>
    %cst_25 = arith.constant 1.000000e+00 : f32
    %40 = vector.broadcast %cst_25 : f32 to vector<16x1xf32>
    %41 = arith.addf %40, %39 : vector<16x1xf32>
    %42 = arith.divf %40, %41 : vector<16x1xf32>
    %c0_26 = arith.constant 0 : index
    %c0_27 = arith.constant 0 : index
    %43 = vector.load %arg10[%c0_26, %c0_27] : memref<16x1xf32, #tpu.memory_space<vmem>>, vector<16x1xf32>
    tpu.vector_store %arg10[%c0_26, %c0_27], %42 {strides = array<i32>} : memref<16x1xf32, #tpu.memory_space<vmem>>, vector<16x1xf32>,
    return
  }
  func.func @transform_0(%arg0: i32) -> (i32, i32) {
    %c0_i32 = arith.constant 0 : i32
    %c0_i32_0 = arith.constant 0 : i32
    return %arg0, %c0_i32 : i32, i32
  }
  func.func @transform_1(%arg0: i32) -> (i32, i32) {
    %c0_i32 = arith.constant 0 : i32
    %c0_i32_0 = arith.constant 0 : i32
    return %arg0, %c0_i32 : i32, i32
  }
  func.func @transform_2(%arg0: i32) -> (i32, i32) {
    %c0_i32 = arith.constant 0 : i32
    %c0_i32_0 = arith.constant 0 : i32
    %c0_i32_1 = arith.constant 0 : i32
    return %c0_i32, %c0_i32_0 : i32, i32
  }
  func.func @transform_3(%arg0: i32) -> (i32, i32) {
    %c0_i32 = arith.constant 0 : i32
    %c0_i32_0 = arith.constant 0 : i32
    %c0_i32_1 = arith.constant 0 : i32
    return %c0_i32, %c0_i32_0 : i32, i32
  }
  func.func @transform_4(%arg0: i32) -> (i32, i32) {
    %c0_i32 = arith.constant 0 : i32
    %c0_i32_0 = arith.constant 0 : i32
    %c0_i32_1 = arith.constant 0 : i32
    return %c0_i32, %c0_i32_0 : i32, i32
  }
  func.func @transform_5(%arg0: i32) -> (i32, i32) {
    %c0_i32 = arith.constant 0 : i32
    %c0_i32_0 = arith.constant 0 : i32
    %c0_i32_1 = arith.constant 0 : i32
    return %c0_i32, %c0_i32_0 : i32, i32
  }
  func.func @transform_6(%arg0: i32) -> (i32, i32) {
    %c0_i32 = arith.constant 0 : i32
    %c0_i32_0 = arith.constant 0 : i32
    %c0_i32_1 = arith.constant 0 : i32
    return %c0_i32, %c0_i32_0 : i32, i32
  }
  func.func @transform_7(%arg0: i32) -> (i32, i32) {
    %c0_i32 = arith.constant 0 : i32
    %c0_i32_0 = arith.constant 0 : i32
    %c0_i32_1 = arith.constant 0 : i32
    return %c0_i32, %c0_i32_0 : i32, i32
  }
  func.func @transform_8(%arg0: i32) -> (i32, i32) {
    %c0_i32 = arith.constant 0 : i32
    %c0_i32_0 = arith.constant 0 : i32
    %c0_i32_1 = arith.constant 0 : i32
    return %c0_i32, %c0_i32_0 : i32, i32
  }
  func.func @transform_9(%arg0: i32) -> (i32, i32) {
    %c0_i32 = arith.constant 0 : i32
    %c0_i32_0 = arith.constant 0 : i32
    return %arg0, %c0_i32 : i32, i32
  }
}

</mosaic_0001>

<llo_original>
// kernel: tpu_custom_call.1
$region0: #{tpu_custom_call.1}
  #allocation0 [shape = 'u32[]', space=smem, size = 0x4, offset = 0x4, fixed_abs, tag = 'smem constant byte address 0x4 - core index']
  #allocation1 [shape = 'u32[144,128]{1,0:T(1,128)}', space=vmem, size = 0x12000, scoped, tag = 'internal scratch']
  %s0 = inlined_call_operand.vmem [shape: f32[16,1], index: 0, kind: input, shape index: {}]
  %s1 = inlined_call_operand.vmem [shape: bf16[16,40], index: 1, kind: input, shape index: {}]
  %s2 = inlined_call_operand.vmem [shape: bf16[40,256], index: 2, kind: input, shape index: {}]
  %s3 = inlined_call_operand.vmem [shape: f32[1,256], index: 3, kind: input, shape index: {}]
  %s4 = inlined_call_operand.hbm [shape: bf16[256,128], index: 4, kind: input, shape index: {}]
  %s5 = inlined_call_operand.vmem [shape: f32[1,128], index: 5, kind: input, shape index: {}]
  %s6 = inlined_call_operand.vmem [shape: bf16[128,64], index: 6, kind: input, shape index: {}]
  %s7 = inlined_call_operand.vmem [shape: f32[1,64], index: 7, kind: input, shape index: {}]
  %s8 = inlined_call_operand.vmem [shape: f32[1,64], index: 8, kind: input, shape index: {}]
  %s9 = inlined_call_operand.vmem [shape: f32[16,1], index: 9, kind: output, shape index: {}]
  %s10 = sld [smem:[#allocation0]]
  $region50: #{tpu_custom_call.1} parent=0
    _
  %s12 = ssub.s32 1, %s10
  %s13 = scalar_select 0, %s12, %s10
  $region1: #{tpu_custom_call.1} parent=0
    #allocation2 [shape = 'u8[65536]{0}', space=vmem, size = 0x10000, scoped, tag = 'input window, operand 4, single buffered']
    #allocation3 [shape = 's32[1]{0}', space=sflag, size = 0x4, scoped, tag = 'scoped memory for tpu_custom_call.1']
    %14 = vsyncpa [#allocation3], 0
    // Predicated region
    $region2: #{tpu_custom_call.1} parent=1 // pred_check
      _
    $region3: #{tpu_custom_call.1} parent=1 // pred_check_branch
      %16 = sbr.rel (0) target = $region5
    $region4: #{tpu_custom_call.1} parent=1 // pred_region
      _
    $region5: #{tpu_custom_call.1} parent=1 // pred_fallthru
      _
    // Predicated region
    $region6: #{tpu_custom_call.1} parent=1 // pred_check
      _
    $region7: #{tpu_custom_call.1} parent=1 // pred_check_branch
      %18 = sbr.rel (0) target = $region9
    $region8: #{tpu_custom_call.1} parent=1 // pred_region
      _
    $region9: #{tpu_custom_call.1} parent=1 // pred_fallthru
      _
    // Predicated region
    $region10: #{tpu_custom_call.1} parent=1 // pred_check
      _
    $region11: #{tpu_custom_call.1} parent=1 // pred_check_branch
      %20 = sbr.rel (0) target = $region13
    $region12: #{tpu_custom_call.1} parent=1 // pred_region
      _
    $region13: #{tpu_custom_call.1} parent=1 // pred_fallthru
      _
    // Predicated region
    $region14: #{tpu_custom_call.1} parent=1 // pred_check
      _
    $region15: #{tpu_custom_call.1} parent=1 // pred_check_branch
      %22 = sbr.rel (0) target = $region17
    $region16: #{tpu_custom_call.1} parent=1 // pred_region
      _
    $region17: #{tpu_custom_call.1} parent=1 // pred_fallthru
      _
    // Predicated region
    $region18: #{tpu_custom_call.1} parent=1 // pred_check
      _
    $region19: #{tpu_custom_call.1} parent=1 // pred_check_branch
      %24 = sbr.rel (0) target = $region21
    $region20: #{tpu_custom_call.1} parent=1 // pred_region
      %s26 = ssub.s32 2048, 2048
      %27 = vsyncadd [#allocation3], %s26
      %s28 = sshll.u32 [#allocation2], 4
      %s29 = int_to_ptr.vmem [resolvable:$true] %s28
      %34 = dma.hbm_to_vmem [thread:$0]  %s4, 2048, %s29, [#allocation3], 64, 64, 4
    $region21: #{tpu_custom_call.1} parent=1 // pred_fallthru
      _
    // Predicated region
    $region22: #{tpu_custom_call.1} parent=1 // pred_check
      _
    $region23: #{tpu_custom_call.1} parent=1 // pred_check_branch
      %36 = sbr.rel (0) target = $region25
    $region24: #{tpu_custom_call.1} parent=1 // pred_region
      _
    $region25: #{tpu_custom_call.1} parent=1 // pred_fallthru
      _
    // Predicated region
    $region26: #{tpu_custom_call.1} parent=1 // pred_check
      _
    $region27: #{tpu_custom_call.1} parent=1 // pred_check_branch
      %38 = sbr.rel (0) target = $region29
    $region28: #{tpu_custom_call.1} parent=1 // pred_region
      _
    $region29: #{tpu_custom_call.1} parent=1 // pred_fallthru
      _
    // Predicated region
    $region30: #{tpu_custom_call.1} parent=1 // pred_check
      _
    $region31: #{tpu_custom_call.1} parent=1 // pred_check_branch
      %40 = sbr.rel (0) target = $region33
    $region32: #{tpu_custom_call.1} parent=1 // pred_region
      _
    $region33: #{tpu_custom_call.1} parent=1 // pred_fallthru
      _
    // Predicated region
    $region34: #{tpu_custom_call.1} parent=1 // pred_check
      _
    $region35: #{tpu_custom_call.1} parent=1 // pred_check_branch
      %42 = sbr.rel (0) target = $region37
    $region36: #{tpu_custom_call.1} parent=1 // pred_region
      _
    $region37: #{tpu_custom_call.1} parent=1 // pred_fallthru
      _
    // Predicated region
    $region38: #{tpu_custom_call.1} parent=1 // pred_check
      _
    $region39: #{tpu_custom_call.1} parent=1 // pred_check_branch
      %44 = sbr.rel (0) target = $region41
    $region40: #{tpu_custom_call.1} parent=1 // pred_region
      %45 = dma.done [#allocation3], 2048
    $region41: #{tpu_custom_call.1} parent=1 // pred_fallthru
      _
    %v47 = vld [vmem:[%s1] sm:$0xf]
    %v48 = vld [vmem:[%s1 + $0x4] sm:$0xf]
    %v49 = vunpack.c.l.bf16 %v47
    %v50 = vunpack.c.l.bf16 %v48
    %v51 = vmul.f32 %v49, %v49
    %v52 = vmul.f32 %v50, %v50
    %vm53 = vcmask 326656
    %v54 = vsel %vm53, %v51, 0.0
    %55 = vadd.xlane.f32.xlu0 %v54
    %v56 = vpop.xlane.xlu0 %55
    %v57 = vsel %vm53, %v52, 0.0
    %58 = vadd.xlane.f32.xlu0 %v57
    %v59 = vpop.xlane.xlu0 %58
    %v60 = vmul.f32 %v56, 0.5
    %v61 = vmul.f32 %v59, 0.5
    %v62 = vld [vmem:[%s2] sm:$0xff]
    %v63 = vld [vmem:[%s2 + $0x8] sm:$0xff]
    %v64 = vld [vmem:[%s2 + $0x10] sm:$0xff]
    %v65 = vld [vmem:[%s2 + $0x18] sm:$0xff]
    %v66 = vld [vmem:[%s2 + $0x20] sm:$0xff]
    %v67 = vld [vmem:[%s3] sm:$0x3]
    %v69 = vlaneseq
    %v70 = vshrl.u32 %v69, 7
    %v71 = vsub.s32 0, %v70
    %v72 = vrot.slane %v67, %v71
    %v73 = vlaneseq
    %v74 = vshrl.u32 %v73, 7
    %v75 = vsub.s32 1, %v74
    %v76 = vrot.slane %v67, %v75
    %v81 = vunpack.c.l.b16 %v47
    %v82 = vunpack.c.l.b16 %v48
    %v83 = vpack.c.b16 %v82, %v81
    %v89 = vunpack.c.l.b16 %v62
    %v90 = vunpack.c.h.b16 %v62
    %v91 = vunpack.c.l.b16 %v63
    %v92 = vunpack.c.h.b16 %v63
    %v93 = vunpack.c.l.b16 %v64
    %v94 = vunpack.c.h.b16 %v64
    %v95 = vunpack.c.l.b16 %v65
    %v96 = vunpack.c.h.b16 %v65
    %v97 = vunpack.c.l.b16 %v66
    %v98 = vunpack.c.h.b16 %v66
    %v99 = vpack.c.b16 %v91, %v89
    %v100 = vpack.c.b16 %v92, %v90
    %v101 = vpack.c.b16 %v95, %v93
    %v102 = vpack.c.b16 %v96, %v94
    %v103 = vpack.c.b16 %v97, %v97
    %v104 = vpack.c.b16 %v98, %v98
    %v110 = vsel %vm53, %v83, 0
    %vm112 = vcmask 1043456
    %v114 = vsel %vm112, %v103, 0
    %v117 = vsel %vm112, %v104, 0
    %119 = vmatprep.subr.bf16.mxu0 0
    %120 = vmatpush1.bf16.msra.mxu0 0
    %121 = vmatprep.subr.bf16.mxu0 0
    %122 = vmatpush1.bf16.msra.mxu0 0
    %123 = vmatprep.subr.bf16.mxu0 0
    %124 = vmatpush1.bf16.msra.mxu0 0
    %125 = vmatprep.subr.bf16.mxu0 0
    %126 = vmatpush1.bf16.msra.mxu0 0
    %127 = vmatprep.subr.bf16.mxu0 0
    %128 = vmatpush1.bf16.msra.mxu0 0
    %129 = vmatprep.subr.bf16.mxu0 %v117
    %130 = vmatpush1.bf16.msra.mxu0 %v114
    %131 = vmatprep.subr.bf16.mxu0 %v102
    %132 = vmatpush1.bf16.msra.mxu0 %v101
    %133 = vmatprep.subr.bf16.mxu0 %v100
    %134 = vmatpush1.bf16.msra.mxu0 %v99
    %135 = vmatprep.subr.bf16.mxu0 0
    %136 = vmatpush2.bf16.msra.mxu0 0
    %137 = vmatprep.subr.bf16.mxu0 0
    %138 = vmatpush2.bf16.msra.mxu0 0
    %139 = vmatprep.subr.bf16.mxu0 0
    %140 = vmatpush2.bf16.msra.mxu0 0
    %141 = vmatprep.subr.bf16.mxu0 0
    %142 = vmatpush2.bf16.msra.mxu0 0
    %143 = vmatprep.subr.bf16.mxu0 0
    %144 = vmatpush2.bf16.msra.mxu0 0
    %145 = vmatprep.subr.bf16.mxu0 0
    %146 = vmatpush2.bf16.msra.mxu0 0
    %147 = vmatprep.subr.bf16.mxu0 0
    %148 = vmatpush2.bf16.msra.mxu0 0
    %149 = vmatprep.subr.bf16.mxu0 0
    %150 = vmatpush2.bf16.msra.mxu0 0
    %151 = vmatprep.mubr.bf16.mxu0 0
    %152 = vmatmul.mubr.bf16.gmra.mxu0 %v110
    %v153 = vpop.f32.mrf.mxu0
    %v154 = vadd.f32 %v72, %v153
    %v155 = vpop.f32.mrf.mxu0
    %v156 = vadd.f32 %v76, %v155
    %v157 = vpop.f32.mrf.mxu0
    %v158 = vadd.f32 %v72, %v157
    %v159 = vpop.f32.mrf.mxu0
    %v160 = vadd.f32 %v76, %v159
    %161 = vdwg.mxu0
    %v162 = vmax.f32 %v154, 0.0
    %v163 = vmax.f32 %v156, 0.0
    %v164 = vmax.f32 %v158, 0.0
    %v165 = vmax.f32 %v160, 0.0
    %v166 = vpack.c.bf16 %v164, %v162
    %v167 = vpack.c.bf16 %v165, %v163
    %v168 = vld [vmem:[#allocation2] sm:$0xf]
    %v169 = vld [vmem:[#allocation2 + $0x4] sm:$0xf]
    %v170 = vld [vmem:[#allocation2 + $0x8] sm:$0xf]
    %v171 = vld [vmem:[#allocation2 + $0xc] sm:$0xf]
    %v172 = vld [vmem:[#allocation2 + $0x10] sm:$0xf]
    %v173 = vld [vmem:[#allocation2 + $0x14] sm:$0xf]
    %v174 = vld [vmem:[#allocation2 + $0x18] sm:$0xf]
    %v175 = vld [vmem:[#allocation2 + $0x1c] sm:$0xf]
    %v176 = vld [vmem:[#allocation2 + $0x20] sm:$0xf]
    %v177 = vld [vmem:[#allocation2 + $0x24] sm:$0xf]
    %v178 = vld [vmem:[#allocation2 + $0x28] sm:$0xf]
    %v179 = vld [vmem:[#allocation2 + $0x2c] sm:$0xf]
    %v180 = vld [vmem:[#allocation2 + $0x30] sm:$0xf]
    %v181 = vld [vmem:[#allocation2 + $0x34] sm:$0xf]
    %v182 = vld [vmem:[#allocation2 + $0x38] sm:$0xf]
    %v183 = vld [vmem:[#allocation2 + $0x3c] sm:$0xf]
    %v184 = vld [vmem:[#allocation2 + $0x40] sm:$0xf]
    %v185 = vld [vmem:[#allocation2 + $0x44] sm:$0xf]
    %v186 = vld [vmem:[#allocation2 + $0x48] sm:$0xf]
    %v187 = vld [vmem:[#allocation2 + $0x4c] sm:$0xf]
    %v188 = vld [vmem:[#allocation2 + $0x50] sm:$0xf]
    %v189 = vld [vmem:[#allocation2 + $0x54] sm:$0xf]
    %v190 = vld [vmem:[#allocation2 + $0x58] sm:$0xf]
    %v191 = vld [vmem:[#allocation2 + $0x5c] sm:$0xf]
    %v192 = vld [vmem:[#allocation2 + $0x60] sm:$0xf]
    %v193 = vld [vmem:[#allocation2 + $0x64] sm:$0xf]
    %v194 = vld [vmem:[#allocation2 + $0x68] sm:$0xf]
    %v195 = vld [vmem:[#allocation2 + $0x6c] sm:$0xf]
    %v196 = vld [vmem:[#allocation2 + $0x70] sm:$0xf]
    %v197 = vld [vmem:[#allocation2 + $0x74] sm:$0xf]
    %v198 = vld [vmem:[#allocation2 + $0x78] sm:$0xf]
    %v199 = vld [vmem:[#allocation2 + $0x7c] sm:$0xf]
    %v200 = vld [vmem:[%s5] sm:$0x1]
    %v202 = vlaneseq
    %v203 = vshrl.u32 %v202, 7
    %v204 = vsub.s32 0, %v203
    %v205 = vrot.slane %v200, %v204
    %v239 = vunpack.c.l.b16 %v168
    %v240 = vunpack.c.l.b16 %v169
    %v241 = vunpack.c.l.b16 %v170
    %v242 = vunpack.c.l.b16 %v171
    %v243 = vunpack.c.l.b16 %v172
    %v244 = vunpack.c.l.b16 %v173
    %v245 = vunpack.c.l.b16 %v174
    %v246 = vunpack.c.l.b16 %v175
    %v247 = vunpack.c.l.b16 %v176
    %v248 = vunpack.c.l.b16 %v177
    %v249 = vunpack.c.l.b16 %v178
    %v250 = vunpack.c.l.b16 %v179
    %v251 = vunpack.c.l.b16 %v180
    %v252 = vunpack.c.l.b16 %v181
    %v253 = vunpack.c.l.b16 %v182
    %v254 = vunpack.c.l.b16 %v183
    %v255 = vunpack.c.l.b16 %v184
    %v256 = vunpack.c.l.b16 %v185
    %v257 = vunpack.c.l.b16 %v186
    %v258 = vunpack.c.l.b16 %v187
    %v259 = vunpack.c.l.b16 %v188
    %v260 = vunpack.c.l.b16 %v189
    %v261 = vunpack.c.l.b16 %v190
    %v262 = vunpack.c.l.b16 %v191
    %v263 = vunpack.c.l.b16 %v192
    %v264 = vunpack.c.l.b16 %v193
    %v265 = vunpack.c.l.b16 %v194
    %v266 = vunpack.c.l.b16 %v195
    %v267 = vunpack.c.l.b16 %v196
    %v268 = vunpack.c.l.b16 %v197
    %v269 = vunpack.c.l.b16 %v198
    %v270 = vunpack.c.l.b16 %v199
    %v271 = vpack.c.b16 %v240, %v239
    %v272 = vpack.c.b16 %v242, %v241
    %v273 = vpack.c.b16 %v244, %v243
    %v274 = vpack.c.b16 %v246, %v245
    %v275 = vpack.c.b16 %v248, %v247
    %v276 = vpack.c.b16 %v250, %v249
    %v277 = vpack.c.b16 %v252, %v251
    %v278 = vpack.c.b16 %v254, %v253
    %v279 = vpack.c.b16 %v256, %v255
    %v280 = vpack.c.b16 %v258, %v257
    %v281 = vpack.c.b16 %v260, %v259
    %v282 = vpack.c.b16 %v262, %v261
    %v283 = vpack.c.b16 %v264, %v263
    %v284 = vpack.c.b16 %v266, %v265
    %v285 = vpack.c.b16 %v268, %v267
    %v286 = vpack.c.b16 %v270, %v269
    %303 = vmatprep.subr.bf16.mxu0 0
    %304 = vmatpush1.bf16.msra.mxu0 %v278
    %305 = vmatprep.subr.bf16.mxu0 0
    %306 = vmatpush1.bf16.msra.mxu0 %v277
    %307 = vmatprep.subr.bf16.mxu0 0
    %308 = vmatpush1.bf16.msra.mxu0 %v276
    %309 = vmatprep.subr.bf16.mxu0 0
    %310 = vmatpush1.bf16.msra.mxu0 %v275
    %311 = vmatprep.subr.bf16.mxu0 0
    %312 = vmatpush1.bf16.msra.mxu0 %v274
    %313 = vmatprep.subr.bf16.mxu0 0
    %314 = vmatpush1.bf16.msra.mxu0 %v273
    %315 = vmatprep.subr.bf16.mxu0 0
    %316 = vmatpush1.bf16.msra.mxu0 %v272
    %317 = vmatprep.subr.bf16.mxu0 0
    %318 = vmatpush1.bf16.msra.mxu0 %v271
    %319 = vmatprep.subr.bf16.mxu0 0
    %320 = vmatpush2.bf16.msra.mxu0 %v286
    %321 = vmatprep.subr.bf16.mxu0 0
    %322 = vmatpush2.bf16.msra.mxu0 %v285
    %323 = vmatprep.subr.bf16.mxu0 0
    %324 = vmatpush2.bf16.msra.mxu0 %v284
    %325 = vmatprep.subr.bf16.mxu0 0
    %326 = vmatpush2.bf16.msra.mxu0 %v283
    %327 = vmatprep.subr.bf16.mxu0 0
    %328 = vmatpush2.bf16.msra.mxu0 %v282
    %329 = vmatprep.subr.bf16.mxu0 0
    %330 = vmatpush2.bf16.msra.mxu0 %v281
    %331 = vmatprep.subr.bf16.mxu0 0
    %332 = vmatpush2.bf16.msra.mxu0 %v280
    %333 = vmatprep.subr.bf16.mxu0 0
    %334 = vmatpush2.bf16.msra.mxu0 %v279
    %335 = vmatprep.mubr.bf16.mxu0 %v167
    %336 = vmatmul.mubr.bf16.gmra.mxu0 %v166
    %v337 = vpop.f32.mrf.mxu0
    %v338 = vadd.f32 %v205, %v337
    %v339 = vpop.f32.mrf.mxu0
    %v340 = vpop.f32.mrf.mxu0
    %v341 = vadd.f32 %v205, %v340
    %v342 = vpop.f32.mrf.mxu0
    %343 = vdwg.mxu0
    %v344 = vmax.f32 %v338, 0.0
    %v345 = vmax.f32 %v341, 0.0
    %v346 = vpack.c.bf16 %v345, %v344
    %v347 = vld [vmem:[%s6] sm:$0xf]
    %v348 = vld [vmem:[%s6 + $0x4] sm:$0xf]
    %v349 = vld [vmem:[%s6 + $0x8] sm:$0xf]
    %v350 = vld [vmem:[%s6 + $0xc] sm:$0xf]
    %v351 = vld [vmem:[%s6 + $0x10] sm:$0xf]
    %v352 = vld [vmem:[%s6 + $0x14] sm:$0xf]
    %v353 = vld [vmem:[%s6 + $0x18] sm:$0xf]
    %v354 = vld [vmem:[%s6 + $0x1c] sm:$0xf]
    %v355 = vld [vmem:[%s6 + $0x20] sm:$0xf]
    %v356 = vld [vmem:[%s6 + $0x24] sm:$0xf]
    %v357 = vld [vmem:[%s6 + $0x28] sm:$0xf]
    %v358 = vld [vmem:[%s6 + $0x2c] sm:$0xf]
    %v359 = vld [vmem:[%s6 + $0x30] sm:$0xf]
    %v360 = vld [vmem:[%s6 + $0x34] sm:$0xf]
    %v361 = vld [vmem:[%s6 + $0x38] sm:$0xf]
    %v362 = vld [vmem:[%s6 + $0x3c] sm:$0xf]
    %v363 = vld [vmem:[%s7] sm:$0x1]
    %v365 = vlaneseq
    %v366 = vshrl.u32 %v365, 7
    %v367 = vsub.s32 0, %v366
    %v368 = vrot.slane %v363, %v367
    %v386 = vunpack.c.l.b16 %v347
    %v387 = vunpack.c.l.b16 %v348
    %v388 = vunpack.c.l.b16 %v349
    %v389 = vunpack.c.l.b16 %v350
    %v390 = vunpack.c.l.b16 %v351
    %v391 = vunpack.c.l.b16 %v352
    %v392 = vunpack.c.l.b16 %v353
    %v393 = vunpack.c.l.b16 %v354
    %v394 = vunpack.c.l.b16 %v355
    %v395 = vunpack.c.l.b16 %v356
    %v396 = vunpack.c.l.b16 %v357
    %v397 = vunpack.c.l.b16 %v358
    %v398 = vunpack.c.l.b16 %v359
    %v399 = vunpack.c.l.b16 %v360
    %v400 = vunpack.c.l.b16 %v361
    %v401 = vunpack.c.l.b16 %v362
    %v402 = vpack.c.b16 %v387, %v386
    %v403 = vpack.c.b16 %v389, %v388
    %v404 = vpack.c.b16 %v391, %v390
    %v405 = vpack.c.b16 %v393, %v392
    %v406 = vpack.c.b16 %v395, %v394
    %v407 = vpack.c.b16 %v397, %v396
    %v408 = vpack.c.b16 %v399, %v398
    %v409 = vpack.c.b16 %v401, %v400
    %418 = vmatprep.subr.bf16.mxu0 0
    %419 = vmatpush1.bf16.msra.mxu0 %v409
    %420 = vmatprep.subr.bf16.mxu0 0
    %421 = vmatpush1.bf16.msra.mxu0 %v408
    %422 = vmatprep.subr.bf16.mxu0 0
    %423 = vmatpush1.bf16.msra.mxu0 %v407
    %424 = vmatprep.subr.bf16.mxu0 0
    %425 = vmatpush1.bf16.msra.mxu0 %v406
    %426 = vmatprep.subr.bf16.mxu0 0
    %427 = vmatpush1.bf16.msra.mxu0 %v405
    %428 = vmatprep.subr.bf16.mxu0 0
    %429 = vmatpush1.bf16.msra.mxu0 %v404
    %430 = vmatprep.subr.bf16.mxu0 0
    %431 = vmatpush1.bf16.msra.mxu0 %v403
    %432 = vmatprep.subr.bf16.mxu0 0
    %433 = vmatpush1.bf16.msra.mxu0 %v402
    %434 = vmatprep.subr.bf16.mxu0 0
    %435 = vmatpush2.bf16.msra.mxu0 0
    %436 = vmatprep.subr.bf16.mxu0 0
    %437 = vmatpush2.bf16.msra.mxu0 0
    %438 = vmatprep.subr.bf16.mxu0 0
    %439 = vmatpush2.bf16.msra.mxu0 0
    %440 = vmatprep.subr.bf16.mxu0 0
    %441 = vmatpush2.bf16.msra.mxu0 0
    %442 = vmatprep.subr.bf16.mxu0 0
    %443 = vmatpush2.bf16.msra.mxu0 0
    %444 = vmatprep.subr.bf16.mxu0 0
    %445 = vmatpush2.bf16.msra.mxu0 0
    %446 = vmatprep.subr.bf16.mxu0 0
    %447 = vmatpush2.bf16.msra.mxu0 0
    %448 = vmatprep.subr.bf16.mxu0 0
    %449 = vmatpush2.bf16.msra.mxu0 0
    %450 = vmatprep.mubr.bf16.mxu0 0
    %451 = vmatmul.mubr.bf16.gmra.mxu0 %v346
    %v452 = vpop.f32.mrf.mxu0
    %v453 = vadd.f32 %v368, %v452
    %v454 = vpop.f32.mrf.mxu0
    %v455 = vpop.f32.mrf.mxu0
    %v456 = vadd.f32 %v368, %v455
    %v457 = vpop.f32.mrf.mxu0
    %458 = vdwg.mxu0
    %v459 = vmax.f32 %v453, 0.0
    %v460 = vmax.f32 %v456, 0.0
    %v461 = vld [vmem:[%s8] sm:$0x1]
    %v463 = vlaneseq
    %v464 = vshrl.u32 %v463, 7
    %v465 = vsub.s32 0, %v464
    %v466 = vrot.slane %v461, %v465
    %v468 = vmul.f32 %v459, %v466
    %v469 = vmul.f32 %v460, %v466
    %vm470 = vcmask 523264
    %v471 = vsel %vm470, %v468, 0.0
    %472 = vadd.xlane.f32.xlu0 %v471
    %v473 = vpop.xlane.xlu0 %472
    %v474 = vsel %vm470, %v469, 0.0
    %475 = vadd.xlane.f32.xlu0 %v474
    %v476 = vpop.xlane.xlu0 %475
    %v477 = vld [vmem:[%s0] sm:$0xff]
    %v478 = vld [vmem:[%s0 + $0x8] sm:$0xff]
    %v479 = vsub.f32 %v477, %v60
    %v480 = vsub.f32 %v478, %v61
    %v481 = vadd.f32 %v479, %v473
    %v482 = vadd.f32 %v480, %v476
    %v483 = vxor.u32 %v481, 2147483648
    %v484 = vxor.u32 %v482, 2147483648
    %v485 = vmul.f32 %v483, 1.442695
    %v486 = vpow.pop %v485
    %v487 = vmul.f32 %v484, 1.442695
    %v488 = vpow.pop %v487
    %v489 = vadd.f32 %v486, 1.0
    %v490 = vadd.f32 %v488, 1.0
    %v491 = vrcp.pop %v489
    %v492 = vmul.f32 1.0, %v491
    %v493 = vrcp.pop %v490
    %v494 = vmul.f32 1.0, %v493
    %vm495 = vcmask 7168
    %496 = vst.msk [vmem:[%s9] sm:$0xff] %vm495, %v492
    %497 = vst.msk [vmem:[%s9 + $0x8] sm:$0xff] %vm495, %v494
    // Predicated region
    $region42: #{tpu_custom_call.1} parent=1 // pred_check
      _
    $region43: #{tpu_custom_call.1} parent=1 // pred_check_branch
      %499 = sbr.rel (0) target = $region45
    $region44: #{tpu_custom_call.1} parent=1 // pred_region
      _
    $region45: #{tpu_custom_call.1} parent=1 // pred_fallthru
      _
    // Predicated region
    $region46: #{tpu_custom_call.1} parent=1 // pred_check
      _
    $region47: #{tpu_custom_call.1} parent=1 // pred_check_branch
      %501 = sbr.rel (0) target = $region49
    $region48: #{tpu_custom_call.1} parent=1 // pred_region
      _
    $region49: #{tpu_custom_call.1} parent=1 // pred_fallthru
      _
    %502 = vsyncpa [#allocation3], 1

</llo_original>
